<compile_context>
chip_gen: v5e
topology: v5e:2x2
jax: 0.10.0
libtpu: 0.0.40
codegen_flags: <defaults>
</compile_context>

<pallas_src>
import jax
import jax.numpy as jnp
from jax.experimental import pallas as pl
from jax.experimental.pallas import tpu as pltpu


# ----------------------------------------------------------------------------
# Default path: Hook.forward is the identity -> return x, no kernel, no copy.
# ----------------------------------------------------------------------------
def hook_forward(x: jax.Array) -> jax.Array:
    """Pallas-side equivalent of Hook.forward(x) -> x (zero-cost no-op).

    Note: the returned array aliases the input; if a *distinct* buffer is
    wanted (e.g. for activation caching), use `hook_forward_copy`.
    """
    return x


# ----------------------------------------------------------------------------
# Optional path: materialized identity copy via a direct HBM->HBM DMA.
# ----------------------------------------------------------------------------
_MAX_CONCURRENT_DMAS = 4
# Only bother splitting into multiple concurrent DMAs above this size.
_SPLIT_MIN_BYTES = 4 * 1024 * 1024  # 4 MiB


def hook_forward_copy(x: jax.Array) -> jax.Array:
    """Identity with a materialized output buffer (direct HBM->HBM DMA)."""
    if x.size == 0:
        return x

    orig_shape = x.shape
    # 0-d scalars: give the DMA a 1-element leading axis (metadata-only reshape).
    xx = x.reshape(1) if x.ndim == 0 else x

    lead = int(xx.shape[0])
    nbytes = int(xx.size) * xx.dtype.itemsize
    if nbytes >= _SPLIT_MIN_BYTES and lead >= 2:
        n_dma = min(_MAX_CONCURRENT_DMAS, lead)
    else:
        n_dma = 1

    # Static, balanced leading-axis chunk boundaries (each chunk non-empty
    # because lead >= n_dma).
    bounds = [(i * lead) // n_dma for i in range(n_dma + 1)]

    def kernel(x_hbm, o_hbm):
        def body(sem):
            copies = []
            for i in range(n_dma):
                lo = bounds[i]
                sz = bounds[i + 1] - bounds[i]
                cp = pltpu.make_async_copy(
                    x_hbm.at[pl.ds(lo, sz)],
                    o_hbm.at[pl.ds(lo, sz)],
                    sem.at[i],
                )
                cp.start()
                copies.append(cp)
            for cp in copies:
                cp.wait()

        pl.run_scoped(body, pltpu.SemaphoreType.DMA((n_dma,)))

    out = pl.pallas_call(
        kernel,
        out_shape=jax.ShapeDtypeStruct(xx.shape, xx.dtype),
        in_specs=[pl.BlockSpec(memory_space=pl.ANY)],
        out_specs=pl.BlockSpec(memory_space=pl.ANY),
    )(xx)

    return out.reshape(orig_shape)


# TODO(synk): hook attachment / activation caching (hook_fwd, hook_bwd, attach,
# release, fwd/bwd properties) are host-side module bookkeeping with no tensor
# compute and have no Pallas equivalent; only the forward pass is implemented.


if __name__ == "__main__":
    key = jax.random.PRNGKey(0)
    # Hook has no parameters; pick a small NCHW-like activation shape.
    x = jax.random.normal(key, (2, 4, 16, 16), dtype=jnp.float32)

    # Default (fast) path: identity is a no-op, no HBM traffic at all.
    y = hook_forward(x)
    assert y is x or bool(jnp.array_equal(y, x))

    # Materialized-copy path (single DMA for small tensors).
    y_copy = hook_forward_copy(x)
    jax.block_until_ready(y_copy)
    assert y_copy.shape == x.shape, (y_copy.shape, x.shape)
    assert y_copy.dtype == x.dtype, (y_copy.dtype, x.dtype)
    assert bool(jnp.array_equal(y_copy, x)), "identity copy mismatch (small)"

    # Exercise the multi-DMA split path on a 4 MiB activation.
    key2 = jax.random.PRNGKey(0)
    x_big = jax.random.normal(key2, (8, 128, 1024), dtype=jnp.float32)
    y_big = hook_forward_copy(x_big)
    jax.block_until_ready(y_big)
    assert y_big.shape == x_big.shape
    assert bool(jnp.array_equal(y_big, x_big)), "identity copy mismatch (split)"

    print("KERNEL_OK")
</pallas_src>

<mosaic_0001>
module attributes {stable_mosaic.version = 11 : i64} {
  func.func @kernel(%arg0: memref<2x4x16x16xf32, #tpu.memory_space<any>>, %arg1: memref<2x4x16x16xf32, #tpu.memory_space<any>>) attributes {dimension_semantics = [], scalar_prefetch = 0 : i64, scratch_operands = 0 : i64, tpu.core_type = #tpu.core_type<tc>} {
    "tpu.region"() ({
      %0 = tpu.sem_alloc : memref<1x!tpu.dma_semaphore, #tpu.memory_space<semaphore_mem>>
      %c0_i32 = arith.constant 0 : i32
      %c0_i32_0 = arith.constant 0 : i32
      %c0_i32_1 = arith.constant 0 : i32
      %c0_i32_2 = arith.constant 0 : i32
      %c0_i32_3 = arith.constant 0 : i32
      %1 = tpu.memref_slice %arg0[%c0_i32_0, %c0_i32_1, %c0_i32_2, %c0_i32_3] : memref<2x4x16x16xf32, #tpu.memory_space<any>> -> memref<2x4x16x16xf32, #tpu.memory_space<any>>
      %c0_i32_4 = arith.constant 0 : i32
      %c0_i32_5 = arith.constant 0 : i32
      %c0_i32_6 = arith.constant 0 : i32
      %c0_i32_7 = arith.constant 0 : i32
      %2 = tpu.memref_slice %arg1[%c0_i32_4, %c0_i32_5, %c0_i32_6, %c0_i32_7] : memref<2x4x16x16xf32, #tpu.memory_space<any>> -> memref<2x4x16x16xf32, #tpu.memory_space<any>>
      %3 = tpu.memref_slice %0[%c0_i32] : memref<1x!tpu.dma_semaphore, #tpu.memory_space<semaphore_mem>> -> memref<1x!tpu.dma_semaphore, #tpu.memory_space<semaphore_mem>>
      %4 = tpu.memref_squeeze %3 : memref<1x!tpu.dma_semaphore, #tpu.memory_space<semaphore_mem>> -> memref<!tpu.dma_semaphore, #tpu.memory_space<semaphore_mem>>
      tpu.enqueue_dma source(%1 : memref<2x4x16x16xf32, #tpu.memory_space<any>>) target(%2 : memref<2x4x16x16xf32, #tpu.memory_space<any>>) target_semaphore(%4 : memref<!tpu.dma_semaphore, #tpu.memory_space<semaphore_mem>>)
      %c0_i32_8 = arith.constant 0 : i32
      %c0_i32_9 = arith.constant 0 : i32
      %c0_i32_10 = arith.constant 0 : i32
      %c0_i32_11 = arith.constant 0 : i32
      %c0_i32_12 = arith.constant 0 : i32
      %5 = tpu.memref_slice %arg0[%c0_i32_9, %c0_i32_10, %c0_i32_11, %c0_i32_12] : memref<2x4x16x16xf32, #tpu.memory_space<any>> -> memref<2x4x16x16xf32, #tpu.memory_space<any>>
      %c0_i32_13 = arith.constant 0 : i32
      %c0_i32_14 = arith.constant 0 : i32
      %c0_i32_15 = arith.constant 0 : i32
      %c0_i32_16 = arith.constant 0 : i32
      %6 = tpu.memref_slice %arg1[%c0_i32_13, %c0_i32_14, %c0_i32_15, %c0_i32_16] : memref<2x4x16x16xf32, #tpu.memory_space<any>> -> memref<2x4x16x16xf32, #tpu.memory_space<any>>
      %7 = tpu.memref_slice %0[%c0_i32_8] : memref<1x!tpu.dma_semaphore, #tpu.memory_space<semaphore_mem>> -> memref<1x!tpu.dma_semaphore, #tpu.memory_space<semaphore_mem>>
      %8 = tpu.memref_squeeze %7 : memref<1x!tpu.dma_semaphore, #tpu.memory_space<semaphore_mem>> -> memref<!tpu.dma_semaphore, #tpu.memory_space<semaphore_mem>>
      tpu.wait_dma2 semaphore(%8 : memref<!tpu.dma_semaphore, #tpu.memory_space<semaphore_mem>>) src(%5 : memref<2x4x16x16xf32, #tpu.memory_space<any>>) dst(%6 : memref<2x4x16x16xf32, #tpu.memory_space<any>>)
      tpu.yield
    }) : () -> ()
    return
  }
}

</mosaic_0001>

<llo_original>
// kernel: tpu_custom_call.1
$region0: #{tpu_custom_call.1}
  #allocation0 [shape = 'u32[]', space=smem, size = 0x4, offset = 0x4, fixed_abs, tag = 'smem constant byte address 0x4 - core index']
  #allocation1 [shape = 'u32[72,128]{1,0:T(1,128)}', space=vmem, size = 0x9000, scoped, tag = 'internal scratch']
  #allocation3 [shape = 's32[]', space=sflag, size = 0x4, offset = 0, fixed_abs, tag = 'sflag constant byte address 0x0 - dummy sync flag']
  #allocation4 [shape = 'u32[0]{0}', space=smem, size = 0, offset = 0, fixed_abs, tag = 'smem constant byte address 0x0 - null']
  %s0 = inlined_call_operand.hbm [shape: f32[2,4,16,16], index: 0, kind: input, shape index: {}]
  %s1 = inlined_call_operand.hbm [shape: f32[2,4,16,16], index: 1, kind: output, shape index: {}]
  %s2 = sld [smem:[#allocation0]]
  $region3: #{tpu_custom_call.1} parent=0
    _
  %s4 = ssub.s32 1, %s2
  %s5 = scalar_select 0, %s4, %s2
  $region2: #{tpu_custom_call.1} parent=0
    #allocation2 [shape = 's32[1]{0}', space=sflag, size = 0x4, scoped, tag = 'scoped memory for tpu_custom_call.1']
    %s7 = sshll.u32 1, 14
    %s8 = sxor.u32 4294967295, %s7
    %s10 = sshll.u32 %s0, 4
    %s11 = int_to_ptr.hbm [resolvable:$true] %s10
    %s12 = sshll.u32 %s1, 4
    %s13 = int_to_ptr.hbm [resolvable:$true] %s12
    %16 = dma.general %s11, 2048, %s13, [#allocation2], [#allocation3], [#allocation4], 0, 0
    %s17 = smul.u32 2, 4
    %s18 = smul.u32 %s17, 16
    %s19 = smul.u32 %s18, 1
    %s20 = sshll.u32 %s19, 4
    %21 = dma.done [#allocation2], %s20

</llo_original>
